<compile_context>
chip_gen: v6e
topology: v6e:2x2x1
jax: 0.10.0
libtpu: 0.0.40
codegen_flags: <defaults>
</compile_context>

<pallas_src>
import functools

import jax
import jax.numpy as jnp
from jax.experimental import pallas as pl
from jax.experimental.pallas import tpu as pltpu


def _round_up(n, m):
    return (n + m - 1) // m * m


def _vmem_budget_bytes():
    """Returns (tile-selection budget, vmem_limit cap) per TPU generation."""
    kind = ""
    try:
        kind = jax.devices()[0].device_kind.lower()
    except Exception:
        pass
    if "v5" in kind or "v6" in kind:
        # 128 MiB physical VMEM; scoped default (16/32 MiB) raised explicitly.
        return 80 << 20, 100 << 20
    if "7" in kind:
        # v7x: 64 MiB per TensorCore; "parallel" grid replicates resident
        # weights + their buffers into both cores' VMEM -> stay tight.
        return 28 << 20, 56 << 20
    # Unknown generation: conservative.
    return 24 << 20, 48 << 20


def qnet_ae_kernel(x_ref, w_in_t_ref, b_in_ref, w_out_t_ref, b_out_ref,
                   out_ref, sse_ref, l1_ref, *, batch_size, needs_mask):
    """One (TB, in_pad) batch tile of the forward pass.

    x_ref      : (TB, in_pad)       input tile, bf16
    w_in_t_ref : (in_pad, hid_pad)  encoder weight, transposed, bf16 (resident)
    b_in_ref   : (1, hid_pad)       encoder bias with pre-encoder bias folded in, f32
    w_out_t_ref: (hid_pad, in_pad)  row-normalized decoder weight, transposed, bf16
    b_out_ref  : (1, in_pad)        decoder bias, f32
    out_ref    : (TB, in_pad)       reconstruction tile, bf16
    sse_ref    : (1, 1, 128)        per-tile sum((out-x)^2), scalar splat
    l1_ref     : (1, 1, 128)        per-tile sum(|acts|),    scalar splat
    """
    tb = x_ref.shape[0]
    pid = pl.program_id(0)

    x_bf = x_ref[...]                                         # bf16

    # encoder: Linear(in_size, hidden) + ReLU.  Pre-encoder bias is already
    # folded into b_in_ref by the wrapper, so x feeds the MXU directly.
    h = jnp.dot(x_bf, w_in_t_ref[...],
                preferred_element_type=jnp.float32) + b_in_ref[...]
    acts = jnp.maximum(h, 0.0)

    # decoder: weight-normed Linear(hidden, in_size)
    out = jnp.dot(acts.astype(jnp.bfloat16), w_out_t_ref[...],
                  preferred_element_type=jnp.float32) + b_out_ref[...]
    out_ref[...] = out.astype(out_ref.dtype)

    xf = x_bf.astype(jnp.float32)

    def write_loss(diff, a):
        sse = jnp.sum(diff * diff)
        l1 = jnp.sum(a)                       # acts >= 0 (ReLU) => |acts| == acts
        sse_ref[...] = jnp.full((1, 1, 128), sse, jnp.float32)
        l1_ref[...] = jnp.full((1, 1, 128), l1, jnp.float32)

    if not needs_mask:
        # Trace-time fast path: no batch padding anywhere.
        write_loss(out - xf, acts)
    else:
        last = pl.num_programs(0) - 1

        @pl.when(pid != last)
        def _():
            write_loss(out - xf, acts)

        @pl.when(pid == last)
        def _():
            # Mask out batch-padding rows of the final tile. Padded feature
            # columns are exactly zero by construction and contribute nothing.
            row = jax.lax.broadcasted_iota(jnp.int32, (tb, 1), 0)
            valid = ((pid * tb + row) < batch_size).astype(jnp.float32)
            write_loss((out - xf) * valid, acts * valid)


def qnet_autoencoder_forward(x, params, *, preencoder_bias=-1.0,
                             loss_sparsity_term=0.01, tb_max=4096):
    """Returns (loss, out) matching QNetAutoencoder.forward (ReLU config)."""
    in_size = x.shape[-1]
    x_flat = x.reshape(-1, in_size)
    B = x_flat.shape[0]

    w_in = params["w_in"].astype(jnp.float32)    # (hidden, in_size) == in_layer.weight
    b_in = params["b_in"].astype(jnp.float32)    # (hidden,)         == in_layer.bias
    v_out = params["v_out"].astype(jnp.float32)  # (in_size, hidden) == weight_norm "v"
    b_out = params["b_out"].astype(jnp.float32)  # (in_size,)        == out_layer.bias
    hidden = w_in.shape[0]

    # weight_norm with gain (original0) pinned to ones: effective decoder weight
    # has each output row of v normalized to unit L2 norm.
    w_out = v_out / jnp.linalg.norm(v_out, axis=1, keepdims=True)

    # Fold the pre-encoder bias into the encoder bias (exact, done once in f32):
    #   (x - p*b_out) @ W_in^T + b_in == x @ W_in^T + (b_in - p * (W_in @ b_out))
    b_in_eff = b_in - preencoder_bias * (w_in @ b_out)

    # Lane-align feature dims (zero padding is loss/output neutral).
    in_pad = _round_up(in_size, 128)
    hid_pad = _round_up(hidden, 128)

    # ---- Analytic batch-tile selection against the per-generation VMEM budget.
    budget, vmem_cap = _vmem_budget_bytes()
    weight_bytes = 2 * (in_pad * hid_pad * 2) * 2     # 2 bf16 mats, 2 buffers each
    bias_bytes = (in_pad + hid_pad) * 4 * 2           # f32 biases, 2 buffers
    per_row = (2 * in_pad * 2 * 2                     # bf16 x + out tiles, 2 buffers
               + in_pad * 12                          # f32 out / diff temporaries
               + hid_pad * 6)                         # f32 acts + bf16 MXU copy
    avail = budget - weight_bytes - bias_bytes - (2 << 20)
    tb = max(avail // per_row, 16)
    tb = min(tb, tb_max, _round_up(B, 16))
    tb = max((tb // 16) * 16, 16)                     # bf16 sublane packing
    num_tiles = pl.cdiv(B, tb)
    b_pad = num_tiles * tb
    needs_mask = (b_pad != B)

    # Pad + pre-transpose operands (feature dim -> 128-wide lane axis).
    # x / reconstruction travel as bf16 to halve the batch-walking HBM bytes.
    x_p = jnp.pad(x_flat, ((0, b_pad - B),
                           (0, in_pad - in_size))).astype(jnp.bfloat16)
    w_in_t = jnp.pad(w_in.T, ((0, in_pad - in_size),
                              (0, hid_pad - hidden))).astype(jnp.bfloat16)
    w_out_t = jnp.pad(w_out.T, ((0, hid_pad - hidden),
                                (0, in_pad - in_size))).astype(jnp.bfloat16)
    b_in_p = jnp.pad(b_in_eff, (0, hid_pad - hidden)).reshape(1, hid_pad)
    b_in_p = b_in_p.astype(jnp.float32)
    b_out_p = jnp.pad(b_out, (0, in_pad - in_size)).reshape(1, in_pad)
    b_out_p = b_out_p.astype(jnp.float32)

    kernel = functools.partial(qnet_ae_kernel, batch_size=B,
                               needs_mask=needs_mask)

    vmem_use = weight_bytes + bias_bytes + tb * per_row + (1 << 20)
    vmem_limit = int(min(vmem_cap, max(int(1.3 * vmem_use), 32 << 20)))

    bytes_accessed = (b_pad * in_pad * 2 * 2          # bf16 x in + out out
                      + 2 * in_pad * hid_pad * 2      # bf16 resident weights
                      + (in_pad + hid_pad) * 4        # biases
                      + 2 * num_tiles * 128 * 4)      # loss partials
    cost = pl.CostEstimate(flops=4 * b_pad * in_pad * hid_pad,
                           transcendentals=0,
                           bytes_accessed=int(bytes_accessed))

    out_p, sse_part, l1_part = pl.pallas_call(
        kernel,
        grid=(num_tiles,),
        in_specs=[
            pl.BlockSpec((tb, in_pad), lambda i: (i, 0)),        # x tile (bf16)
            pl.BlockSpec((in_pad, hid_pad), lambda i: (0, 0)),   # resident W_in^T
            pl.BlockSpec((1, hid_pad), lambda i: (0, 0)),        # folded b_in
            pl.BlockSpec((hid_pad, in_pad), lambda i: (0, 0)),   # resident W_out^T
            pl.BlockSpec((1, in_pad), lambda i: (0, 0)),         # b_out
        ],
        out_specs=[
            pl.BlockSpec((tb, in_pad), lambda i: (i, 0)),        # reconstruction
            pl.BlockSpec((1, 1, 128), lambda i: (i, 0, 0)),      # sse partials
            pl.BlockSpec((1, 1, 128), lambda i: (i, 0, 0)),      # l1 partials
        ],
        out_shape=[
            jax.ShapeDtypeStruct((b_pad, in_pad), jnp.bfloat16),
            jax.ShapeDtypeStruct((num_tiles, 1, 128), jnp.float32),
            jax.ShapeDtypeStruct((num_tiles, 1, 128), jnp.float32),
        ],
        compiler_params=pltpu.CompilerParams(
            dimension_semantics=("parallel",),
            vmem_limit_bytes=vmem_limit),
        cost_estimate=cost,
    )(x_p, w_in_t, b_in_p, w_out_t, b_out_p)

    out = out_p[:B, :in_size].astype(x.dtype).reshape(x.shape)
    sse = jnp.sum(sse_part[:, 0, 0])
    l1 = jnp.sum(l1_part[:, 0, 0])
    loss = sse / (B * in_size) + loss_sparsity_term * l1
    return loss, out


def _reference_forward(x, params, *, preencoder_bias=-1.0,
                       loss_sparsity_term=0.01):
    """Plain-JAX (f32) reference for a correctness sanity check."""
    in_size = x.shape[-1]
    xf = x.reshape(-1, in_size)
    w_out = params["v_out"] / jnp.linalg.norm(params["v_out"], axis=1,
                                              keepdims=True)
    with_bias = xf - preencoder_bias * params["b_out"]
    acts = jnp.maximum(with_bias @ params["w_in"].T + params["b_in"], 0.0)
    out = acts @ w_out.T + params["b_out"]
    loss = jnp.mean((out - xf) ** 2) + loss_sparsity_term * jnp.sum(
        jnp.abs(acts))
    return loss, out.reshape(x.shape)


if __name__ == "__main__":
    in_size, hidden_size = 128, 64   # hidden=64 exercises lane padding to 128

    key = jax.random.PRNGKey(0)
    k1, k2, k3, k4, k5, k6, k7 = jax.random.split(key, 7)
    params = {
        "w_in": jax.random.normal(k1, (hidden_size, in_size), jnp.float32) * 0.05,
        "b_in": jax.random.normal(k2, (hidden_size,), jnp.float32) * 0.01,
        "v_out": jax.random.normal(k3, (in_size, hidden_size), jnp.float32) * 0.05,
        "b_out": jax.random.normal(k4, (in_size,), jnp.float32) * 0.01,
    }

    # bf16 MXU operands / bf16 x+out HBM traffic -> looser tolerance than f32.
    rtol = atol = 2e-2

    def _check(x, **kw):
        loss, out = qnet_autoencoder_forward(x, params, **kw)
        jax.block_until_ready((loss, out))
        ref_loss, ref_out = _reference_forward(x, params)
        assert out.shape == x.shape and out.dtype == x.dtype
        assert jnp.allclose(out, ref_out, rtol=rtol, atol=atol), "out mismatch"
        assert jnp.allclose(loss, ref_loss, rtol=rtol, atol=atol), "loss mismatch"

    # Case 1: leading shape (2, 4), B = 8 rows (batch padded to 16, mask path).
    _check(jax.random.normal(k5, (2, 4, in_size), jnp.float32))

    # Case 2: leading shape (3, 5), B = 15 rows (mask path, odd batch).
    _check(jax.random.normal(k6, (3, 5, in_size), jnp.float32))

    # Case 3: B = 128 rows with tb_max=32 -> 4 grid tiles, unmasked fast path.
    _check(jax.random.normal(k7, (8, 16, in_size), jnp.float32), tb_max=32)

    print("KERNEL_OK")
</pallas_src>

<mosaic_0001>
module attributes {stable_mosaic.version = 11 : i64} {
  func.func @qnet_ae_kernel(%arg0: i32, %arg1: memref<16x128xbf16, #tpu.memory_space<vmem>>, %arg2: memref<128x128xbf16, #tpu.memory_space<vmem>>, %arg3: memref<1x128xf32, #tpu.memory_space<vmem>>, %arg4: memref<128x128xbf16, #tpu.memory_space<vmem>>, %arg5: memref<1x128xf32, #tpu.memory_space<vmem>>, %arg6: memref<16x128xbf16, #tpu.memory_space<vmem>>, %arg7: memref<1x1x128xf32, #tpu.memory_space<vmem>>, %arg8: memref<1x1x128xf32, #tpu.memory_space<vmem>>) attributes {dimension_semantics = [#tpu.dimension_semantics<parallel>], iteration_bounds = array<i64: 1>, scalar_prefetch = 0 : i64, scratch_operands = 0 : i64, tpu.core_type = #tpu.core_type<tc>, window_params = [{transform_indices = @transform_0, window_bounds = array<i64: 16, 128>}, {pipeline_mode = #tpu.pipeline_mode<synchronous>, transform_indices = @transform_1, window_bounds = array<i64: 128, 128>}, {pipeline_mode = #tpu.pipeline_mode<synchronous>, transform_indices = @transform_2, window_bounds = array<i64: 1, 128>}, {pipeline_mode = #tpu.pipeline_mode<synchronous>, transform_indices = @transform_3, window_bounds = array<i64: 128, 128>}, {pipeline_mode = #tpu.pipeline_mode<synchronous>, transform_indices = @transform_4, window_bounds = array<i64: 1, 128>}, {transform_indices = @transform_5, window_bounds = array<i64: 16, 128>}, {transform_indices = @transform_6, window_bounds = array<i64: 1, 1, 128>}, {transform_indices = @transform_7, window_bounds = array<i64: 1, 1, 128>}]} {
    %c0 = arith.constant 0 : index
    %c0_0 = arith.constant 0 : index
    %0 = vector.load %arg1[%c0, %c0_0] : memref<16x128xbf16, #tpu.memory_space<vmem>>, vector<16x128xbf16>
    %c0_1 = arith.constant 0 : index
    %c0_2 = arith.constant 0 : index
    %1 = vector.load %arg2[%c0_1, %c0_2] : memref<128x128xbf16, #tpu.memory_space<vmem>>, vector<128x128xbf16>
    %cst = arith.constant dense<0.000000e+00> : vector<16x128xf32>
    %2 = tpu.matmul %0, %1, %cst {dimension_numbers = #tpu.dot_dimension_numbers<[1], [0], [0], [1], [0, 0, 1, 1], [], []>} : vector<16x128xbf16>, vector<128x128xbf16>, vector<16x128xf32> -> vector<16x128xf32>
    %c0_3 = arith.constant 0 : index
    %c0_4 = arith.constant 0 : index
    %3 = vector.load %arg3[%c0_3, %c0_4] : memref<1x128xf32, #tpu.memory_space<vmem>>, vector<1x128xf32>
    %4 = vector.broadcast %3 : vector<1x128xf32> to vector<16x128xf32>
    %5 = arith.addf %2, %4 : vector<16x128xf32>
    %cst_5 = arith.constant 0.000000e+00 : f32
    %6 = vector.broadcast %cst_5 : f32 to vector<16x128xf32>
    %7 = arith.maximumf %5, %6 : vector<16x128xf32>
    %8 = arith.truncf %7 : vector<16x128xf32> to vector<16x128xbf16>
    %c0_6 = arith.constant 0 : index
    %c0_7 = arith.constant 0 : index
    %9 = vector.load %arg4[%c0_6, %c0_7] : memref<128x128xbf16, #tpu.memory_space<vmem>>, vector<128x128xbf16>
    %cst_8 = arith.constant dense<0.000000e+00> : vector<16x128xf32>
    %10 = tpu.matmul %8, %9, %cst_8 {dimension_numbers = #tpu.dot_dimension_numbers<[1], [0], [0], [1], [0, 0, 1, 1], [], []>} : vector<16x128xbf16>, vector<128x128xbf16>, vector<16x128xf32> -> vector<16x128xf32>
    %c0_9 = arith.constant 0 : index
    %c0_10 = arith.constant 0 : index
    %11 = vector.load %arg5[%c0_9, %c0_10] : memref<1x128xf32, #tpu.memory_space<vmem>>, vector<1x128xf32>
    %12 = vector.broadcast %11 : vector<1x128xf32> to vector<16x128xf32>
    %13 = arith.addf %10, %12 : vector<16x128xf32>
    %14 = arith.truncf %13 : vector<16x128xf32> to vector<16x128xbf16>
    %c0_11 = arith.constant 0 : index
    %c0_12 = arith.constant 0 : index
    %15 = vector.load %arg6[%c0_11, %c0_12] : memref<16x128xbf16, #tpu.memory_space<vmem>>, vector<16x128xbf16>
    tpu.vector_store %arg6[%c0_11, %c0_12], %14 {strides = array<i32>} : memref<16x128xbf16, #tpu.memory_space<vmem>>, vector<16x128xbf16>,
    %16 = arith.extf %0 : vector<16x128xbf16> to vector<16x128xf32>
    %c0_i32 = arith.constant 0 : i32
    %17 = arith.cmpi ne, %arg0, %c0_i32 : i32
    %18 = arith.extui %17 : i1 to i32
    %c0_i32_13 = arith.constant 0 : i32
    %19 = arith.cmpi ne, %18, %c0_i32_13 : i32
    scf.if %19 {
      %23 = arith.subf %13, %16 : vector<16x128xf32>
      %24 = arith.mulf %23, %23 : vector<16x128xf32>
      %25 = vector.shape_cast %24 : vector<16x128xf32> to vector<1x16x128xf32>
      %cst_16 = arith.constant dense<0.000000e+00> : vector<1xf32>
      %26 = vector.multi_reduction <add>, %25, %cst_16 [1, 2] : vector<1x16x128xf32> to vector<1xf32>
      %27 = vector.shape_cast %26 : vector<1xf32> to vector<1x1x1xf32>
      %28 = vector.extract %27[0, 0, 0] : f32 from vector<1x1x1xf32>
      %29 = vector.shape_cast %7 : vector<16x128xf32> to vector<1x16x128xf32>
      %cst_17 = arith.constant dense<0.000000e+00> : vector<1xf32>
      %30 = vector.multi_reduction <add>, %29, %cst_17 [1, 2] : vector<1x16x128xf32> to vector<1xf32>
      %31 = vector.shape_cast %30 : vector<1xf32> to vector<1x1x1xf32>
      %32 = vector.extract %31[0, 0, 0] : f32 from vector<1x1x1xf32>
      %33 = vector.broadcast %28 : f32 to vector<1x1x128xf32>
      %c0_18 = arith.constant 0 : index
      %c0_19 = arith.constant 0 : index
      %c0_20 = arith.constant 0 : index
      %34 = vector.load %arg7[%c0_18, %c0_19, %c0_20] : memref<1x1x128xf32, #tpu.memory_space<vmem>>, vector<1x1x128xf32>
      tpu.vector_store %arg7[%c0_18, %c0_19, %c0_20], %33 {strides = array<i32>} : memref<1x1x128xf32, #tpu.memory_space<vmem>>, vector<1x1x128xf32>,
      %35 = vector.broadcast %32 : f32 to vector<1x1x128xf32>
      %c0_21 = arith.constant 0 : index
      %c0_22 = arith.constant 0 : index
      %c0_23 = arith.constant 0 : index
      %36 = vector.load %arg8[%c0_21, %c0_22, %c0_23] : memref<1x1x128xf32, #tpu.memory_space<vmem>>, vector<1x1x128xf32>
      tpu.vector_store %arg8[%c0_21, %c0_22, %c0_23], %35 {strides = array<i32>} : memref<1x1x128xf32, #tpu.memory_space<vmem>>, vector<1x1x128xf32>,
    } else {
    }
    %c0_i32_14 = arith.constant 0 : i32
    %20 = arith.cmpi eq, %arg0, %c0_i32_14 : i32
    %21 = arith.extui %20 : i1 to i32
    %c0_i32_15 = arith.constant 0 : i32
    %22 = arith.cmpi ne, %21, %c0_i32_15 : i32
    scf.if %22 {
      %23 = tpu.iota {dimensions = array<i32: 0>} : vector<16x1xi32>
      %c16_i32 = arith.constant 16 : i32
      %24 = arith.muli %arg0, %c16_i32 : i32
      %25 = vector.broadcast %24 : i32 to vector<16x1xi32>
      %26 = arith.addi %25, %23 : vector<16x1xi32>
      %c8_i32 = arith.constant 8 : i32
      %27 = vector.broadcast %c8_i32 : i32 to vector<16x1xi32>
      %28 = arith.cmpi slt, %26, %27 : vector<16x1xi32>
      %29 = arith.extui %28 : vector<16x1xi1> to vector<16x1xi32>
      %30 = arith.sitofp %29 : vector<16x1xi32> to vector<16x1xf32>
      %31 = arith.subf %13, %16 : vector<16x128xf32>
      %32 = vector.broadcast %30 : vector<16x1xf32> to vector<16x128xf32>
      %33 = arith.mulf %31, %32 : vector<16x128xf32>
      %34 = vector.broadcast %30 : vector<16x1xf32> to vector<16x128xf32>
      %35 = arith.mulf %7, %34 : vector<16x128xf32>
      %36 = arith.mulf %33, %33 : vector<16x128xf32>
      %37 = vector.shape_cast %36 : vector<16x128xf32> to vector<1x16x128xf32>
      %cst_16 = arith.constant dense<0.000000e+00> : vector<1xf32>
      %38 = vector.multi_reduction <add>, %37, %cst_16 [1, 2] : vector<1x16x128xf32> to vector<1xf32>
      %39 = vector.shape_cast %38 : vector<1xf32> to vector<1x1x1xf32>
      %40 = vector.extract %39[0, 0, 0] : f32 from vector<1x1x1xf32>
      %41 = vector.shape_cast %35 : vector<16x128xf32> to vector<1x16x128xf32>
      %cst_17 = arith.constant dense<0.000000e+00> : vector<1xf32>
      %42 = vector.multi_reduction <add>, %41, %cst_17 [1, 2] : vector<1x16x128xf32> to vector<1xf32>
      %43 = vector.shape_cast %42 : vector<1xf32> to vector<1x1x1xf32>
      %44 = vector.extract %43[0, 0, 0] : f32 from vector<1x1x1xf32>
      %45 = vector.broadcast %40 : f32 to vector<1x1x128xf32>
      %c0_18 = arith.constant 0 : index
      %c0_19 = arith.constant 0 : index
      %c0_20 = arith.constant 0 : index
      %46 = vector.load %arg7[%c0_18, %c0_19, %c0_20] : memref<1x1x128xf32, #tpu.memory_space<vmem>>, vector<1x1x128xf32>
      tpu.vector_store %arg7[%c0_18, %c0_19, %c0_20], %45 {strides = array<i32>} : memref<1x1x128xf32, #tpu.memory_space<vmem>>, vector<1x1x128xf32>,
      %47 = vector.broadcast %44 : f32 to vector<1x1x128xf32>
      %c0_21 = arith.constant 0 : index
      %c0_22 = arith.constant 0 : index
      %c0_23 = arith.constant 0 : index
      %48 = vector.load %arg8[%c0_21, %c0_22, %c0_23] : memref<1x1x128xf32, #tpu.memory_space<vmem>>, vector<1x1x128xf32>
      tpu.vector_store %arg8[%c0_21, %c0_22, %c0_23], %47 {strides = array<i32>} : memref<1x1x128xf32, #tpu.memory_space<vmem>>, vector<1x1x128xf32>,
    } else {
    }
    return
  }
  func.func @transform_0(%arg0: i32) -> (i32, i32) {
    %c0_i32 = arith.constant 0 : i32
    %c0_i32_0 = arith.constant 0 : i32
    return %arg0, %c0_i32 : i32, i32
  }
  func.func @transform_1(%arg0: i32) -> (i32, i32) {
    %c0_i32 = arith.constant 0 : i32
    %c0_i32_0 = arith.constant 0 : i32
    %c0_i32_1 = arith.constant 0 : i32
    return %c0_i32, %c0_i32_0 : i32, i32
  }
  func.func @transform_2(%arg0: i32) -> (i32, i32) {
    %c0_i32 = arith.constant 0 : i32
    %c0_i32_0 = arith.constant 0 : i32
    %c0_i32_1 = arith.constant 0 : i32
    return %c0_i32, %c0_i32_0 : i32, i32
  }
  func.func @transform_3(%arg0: i32) -> (i32, i32) {
    %c0_i32 = arith.constant 0 : i32
    %c0_i32_0 = arith.constant 0 : i32
    %c0_i32_1 = arith.constant 0 : i32
    return %c0_i32, %c0_i32_0 : i32, i32
  }
  func.func @transform_4(%arg0: i32) -> (i32, i32) {
    %c0_i32 = arith.constant 0 : i32
    %c0_i32_0 = arith.constant 0 : i32
    %c0_i32_1 = arith.constant 0 : i32
    return %c0_i32, %c0_i32_0 : i32, i32
  }
  func.func @transform_5(%arg0: i32) -> (i32, i32) {
    %c0_i32 = arith.constant 0 : i32
    %c0_i32_0 = arith.constant 0 : i32
    return %arg0, %c0_i32 : i32, i32
  }
  func.func @transform_6(%arg0: i32) -> (i32, i32, i32) {
    %c0_i32 = arith.constant 0 : i32
    %c0_i32_0 = arith.constant 0 : i32
    %c0_i32_1 = arith.constant 0 : i32
    return %arg0, %c0_i32, %c0_i32_0 : i32, i32, i32
  }
  func.func @transform_7(%arg0: i32) -> (i32, i32, i32) {
    %c0_i32 = arith.constant 0 : i32
    %c0_i32_0 = arith.constant 0 : i32
    %c0_i32_1 = arith.constant 0 : i32
    return %arg0, %c0_i32, %c0_i32_0 : i32, i32, i32
  }
}

</mosaic_0001>

<llo_original>
// kernel: tpu_custom_call.1
$region0: #{tpu_custom_call.1}
  #allocation0 [shape = 'u32[]', space=smem, size = 0x4, offset = 0x4, fixed_abs, tag = 'smem constant byte address 0x4 - core index']
  #allocation1 [shape = 'u32[144,128]{1,0:T(1,128)}', space=vmem, size = 0x12000, scoped, tag = 'internal scratch']
  %s0 = inlined_call_operand.hbm [shape: bf16[16,128], index: 0, kind: input, shape index: {}]
  %s1 = inlined_call_operand.hbm [shape: bf16[128,128], index: 1, kind: input, shape index: {}]
  %s2 = inlined_call_operand.vmem [shape: f32[1,128], index: 2, kind: input, shape index: {}]
  %s3 = inlined_call_operand.hbm [shape: bf16[128,128], index: 3, kind: input, shape index: {}]
  %s4 = inlined_call_operand.vmem [shape: f32[1,128], index: 4, kind: input, shape index: {}]
  %s5 = inlined_call_operand.hbm [shape: bf16[16,128], index: 5, kind: output, shape index: {0}]
  %s6 = inlined_call_operand.hbm [shape: f32[1,1,128], index: 6, kind: output, shape index: {1}]
  %s7 = inlined_call_operand.hbm [shape: f32[1,1,128], index: 7, kind: output, shape index: {2}]
  %8 = xla_tuple %s5, %s6, %s7
  %s9 = sld [smem:[#allocation0]]
  $region66: #{tpu_custom_call.1} parent=0
    _
  %s11 = ssub.s32 1, %s9
  %s12 = scalar_select 0, %s11, %s9
  $region1: #{tpu_custom_call.1} parent=0
    #allocation2 [shape = 'u8[4096]{0}', space=vmem, size = 0x1000, scoped, tag = 'input window, operand 0, single buffered']
    #allocation3 [shape = 's32[1]{0}', space=sflag, size = 0x4, scoped, tag = 'scoped memory for tpu_custom_call.1']
    #allocation4 [shape = 's32[1]{0}', space=sflag, size = 0x4, scoped, tag = 'scoped memory for tpu_custom_call.1']
    #allocation5 [shape = 'u8[32768]{0}', space=vmem, size = 0x8000, scoped, tag = 'input window, operand 1, single buffered']
    #allocation6 [shape = 's32[1]{0}', space=sflag, size = 0x4, scoped, tag = 'scoped memory for tpu_custom_call.1']
    #allocation7 [shape = 'u8[32768]{0}', space=vmem, size = 0x8000, scoped, tag = 'input window, operand 3, single buffered']
    #allocation8 [shape = 'u8[4096]{0}', space=vmem, size = 0x1000, scoped, tag = 'output window, operand 0, single buffered']
    #allocation9 [shape = 'u8[512]{0}', space=vmem, size = 0x400, scoped, tag = 'output window, operand 1, single buffered']
    #allocation10 [shape = 's32[1]{0}', space=sflag, size = 0x4, scoped, tag = 'scoped memory for tpu_custom_call.1']
    #allocation11 [shape = 'u8[512]{0}', space=vmem, size = 0x400, scoped, tag = 'output window, operand 2, single buffered']
    %13 = vsyncpa [#allocation3], 0
    %14 = vsyncpa [#allocation6], 0
    %15 = vsyncpa [#allocation4], 0
    %16 = vsyncpa [#allocation10], 0
    // Predicated region
    $region2: #{tpu_custom_call.1} parent=1 // pred_check
      _
    $region3: #{tpu_custom_call.1} parent=1 // pred_check_branch
      %18 = sbr.rel (0) target = $region5
    $region4: #{tpu_custom_call.1} parent=1 // pred_region
      %s20 = ssub.s32 128, 128
      %21 = vsyncadd [#allocation3], %s20
      %s22 = sshll.u32 [#allocation2], 4
      %s23 = int_to_ptr.vmem [resolvable:$true] %s22
      %28 = dma.hbm_to_vmem [thread:$0]  %s0, 128, %s23, [#allocation3], 64, 64, 4
    $region5: #{tpu_custom_call.1} parent=1 // pred_fallthru
      _
    // Predicated region
    $region6: #{tpu_custom_call.1} parent=1 // pred_check
      _
    $region7: #{tpu_custom_call.1} parent=1 // pred_check_branch
      %30 = sbr.rel (0) target = $region9
    $region8: #{tpu_custom_call.1} parent=1 // pred_region
      %s32 = ssub.s32 1024, 1024
      %33 = vsyncadd [#allocation6], %s32
      %s34 = sshll.u32 [#allocation5], 4
      %s35 = int_to_ptr.vmem [resolvable:$true] %s34
      %40 = dma.hbm_to_vmem [thread:$0]  %s1, 1024, %s35, [#allocation6], 64, 64, 4
    $region9: #{tpu_custom_call.1} parent=1 // pred_fallthru
      _
    // Predicated region
    $region10: #{tpu_custom_call.1} parent=1 // pred_check
      _
    $region11: #{tpu_custom_call.1} parent=1 // pred_check_branch
      %42 = sbr.rel (0) target = $region13
    $region12: #{tpu_custom_call.1} parent=1 // pred_region
      _
    $region13: #{tpu_custom_call.1} parent=1 // pred_fallthru
      _
    // Predicated region
    $region14: #{tpu_custom_call.1} parent=1 // pred_check
      _
    $region15: #{tpu_custom_call.1} parent=1 // pred_check_branch
      %44 = sbr.rel (0) target = $region17
    $region16: #{tpu_custom_call.1} parent=1 // pred_region
      %s46 = ssub.s32 1024, 1024
      %47 = vsyncadd [#allocation6], %s46
      %s48 = sshll.u32 [#allocation7], 4
      %s49 = int_to_ptr.vmem [resolvable:$true] %s48
      %54 = dma.hbm_to_vmem [thread:$0]  %s3, 1024, %s49, [#allocation6], 64, 64, 4
    $region17: #{tpu_custom_call.1} parent=1 // pred_fallthru
      _
    // Predicated region
    $region18: #{tpu_custom_call.1} parent=1 // pred_check
      _
    $region19: #{tpu_custom_call.1} parent=1 // pred_check_branch
      %56 = sbr.rel (0) target = $region21
    $region20: #{tpu_custom_call.1} parent=1 // pred_region
      _
    $region21: #{tpu_custom_call.1} parent=1 // pred_fallthru
      _
    // Predicated region
    $region22: #{tpu_custom_call.1} parent=1 // pred_check
      _
    $region23: #{tpu_custom_call.1} parent=1 // pred_check_branch
      %58 = sbr.rel (0) target = $region25
    $region24: #{tpu_custom_call.1} parent=1 // pred_region
      %59 = dma.done [#allocation3], 128
    $region25: #{tpu_custom_call.1} parent=1 // pred_fallthru
      _
    // Predicated region
    $region26: #{tpu_custom_call.1} parent=1 // pred_check
      _
    $region27: #{tpu_custom_call.1} parent=1 // pred_check_branch
      %61 = sbr.rel (0) target = $region29
    $region28: #{tpu_custom_call.1} parent=1 // pred_region
      %62 = dma.done [#allocation6], 1024
    $region29: #{tpu_custom_call.1} parent=1 // pred_fallthru
      _
    // Predicated region
    $region30: #{tpu_custom_call.1} parent=1 // pred_check
      _
    $region31: #{tpu_custom_call.1} parent=1 // pred_check_branch
      %64 = sbr.rel (0) target = $region33
    $region32: #{tpu_custom_call.1} parent=1 // pred_region
      %65 = dma.done [#allocation6], 1024
    $region33: #{tpu_custom_call.1} parent=1 // pred_fallthru
      _
    %v67 = vld [vmem:[#allocation2] sm:$0xf]
    %v68 = vld [vmem:[#allocation2 + $0x4] sm:$0xf]
    %v69 = vld [vmem:[#allocation5] sm:$0xf]
    %v70 = vld [vmem:[#allocation5 + $0x4] sm:$0xf]
    %v71 = vld [vmem:[#allocation5 + $0x8] sm:$0xf]
    %v72 = vld [vmem:[#allocation5 + $0xc] sm:$0xf]
    %v73 = vld [vmem:[#allocation5 + $0x10] sm:$0xf]
    %v74 = vld [vmem:[#allocation5 + $0x14] sm:$0xf]
    %v75 = vld [vmem:[#allocation5 + $0x18] sm:$0xf]
    %v76 = vld [vmem:[#allocation5 + $0x1c] sm:$0xf]
    %v77 = vld [vmem:[#allocation5 + $0x20] sm:$0xf]
    %v78 = vld [vmem:[#allocation5 + $0x24] sm:$0xf]
    %v79 = vld [vmem:[#allocation5 + $0x28] sm:$0xf]
    %v80 = vld [vmem:[#allocation5 + $0x2c] sm:$0xf]
    %v81 = vld [vmem:[#allocation5 + $0x30] sm:$0xf]
    %v82 = vld [vmem:[#allocation5 + $0x34] sm:$0xf]
    %v83 = vld [vmem:[#allocation5 + $0x38] sm:$0xf]
    %v84 = vld [vmem:[#allocation5 + $0x3c] sm:$0xf]
    %v85 = vld [vmem:[%s2] sm:$0x1]
    %v87 = vlaneseq
    %v88 = vshrl.u32 %v87, 7
    %v89 = vsub.s32 0, %v88
    %v90 = vrot.slane %v85, %v89
    %v94 = vunpack.c.l.b16 %v67
    %v95 = vunpack.c.l.b16 %v68
    %v96 = vpack.c.b16 %v95, %v94
    %v114 = vunpack.c.l.b16 %v69
    %v115 = vunpack.c.l.b16 %v70
    %v116 = vunpack.c.l.b16 %v71
    %v117 = vunpack.c.l.b16 %v72
    %v118 = vunpack.c.l.b16 %v73
    %v119 = vunpack.c.l.b16 %v74
    %v120 = vunpack.c.l.b16 %v75
    %v121 = vunpack.c.l.b16 %v76
    %v122 = vunpack.c.l.b16 %v77
    %v123 = vunpack.c.l.b16 %v78
    %v124 = vunpack.c.l.b16 %v79
    %v125 = vunpack.c.l.b16 %v80
    %v126 = vunpack.c.l.b16 %v81
    %v127 = vunpack.c.l.b16 %v82
    %v128 = vunpack.c.l.b16 %v83
    %v129 = vunpack.c.l.b16 %v84
    %v130 = vpack.c.b16 %v115, %v114
    %v131 = vpack.c.b16 %v117, %v116
    %v132 = vpack.c.b16 %v119, %v118
    %v133 = vpack.c.b16 %v121, %v120
    %v134 = vpack.c.b16 %v123, %v122
    %v135 = vpack.c.b16 %v125, %v124
    %v136 = vpack.c.b16 %v127, %v126
    %v137 = vpack.c.b16 %v129, %v128
    %146 = vmatprep.subr.bf16.mxu0 0
    %147 = vmatpush1.bf16.msra.mxu0 %v137
    %148 = vmatprep.subr.bf16.mxu0 0
    %149 = vmatpush1.bf16.msra.mxu0 %v136
    %150 = vmatprep.subr.bf16.mxu0 0
    %151 = vmatpush1.bf16.msra.mxu0 %v135
    %152 = vmatprep.subr.bf16.mxu0 0
    %153 = vmatpush1.bf16.msra.mxu0 %v134
    %154 = vmatprep.subr.bf16.mxu0 0
    %155 = vmatpush1.bf16.msra.mxu0 %v133
    %156 = vmatprep.subr.bf16.mxu0 0
    %157 = vmatpush1.bf16.msra.mxu0 %v132
    %158 = vmatprep.subr.bf16.mxu0 0
    %159 = vmatpush1.bf16.msra.mxu0 %v131
    %160 = vmatprep.subr.bf16.mxu0 0
    %161 = vmatpush1.bf16.msra.mxu0 %v130
    %162 = vmatprep.subr.bf16.mxu0 0
    %163 = vmatpush2.bf16.msra.mxu0 0
    %164 = vmatprep.subr.bf16.mxu0 0
    %165 = vmatpush2.bf16.msra.mxu0 0
    %166 = vmatprep.subr.bf16.mxu0 0
    %167 = vmatpush2.bf16.msra.mxu0 0
    %168 = vmatprep.subr.bf16.mxu0 0
    %169 = vmatpush2.bf16.msra.mxu0 0
    %170 = vmatprep.subr.bf16.mxu0 0
    %171 = vmatpush2.bf16.msra.mxu0 0
    %172 = vmatprep.subr.bf16.mxu0 0
    %173 = vmatpush2.bf16.msra.mxu0 0
    %174 = vmatprep.subr.bf16.mxu0 0
    %175 = vmatpush2.bf16.msra.mxu0 0
    %176 = vmatprep.subr.bf16.mxu0 0
    %177 = vmatpush2.bf16.msra.mxu0 0
    %178 = vmatprep.mubr.bf16.mxu0 0
    %179 = vmatmul.mubr.bf16.gmra.mxu0 %v96
    %v180 = vpop.f32.mrf.mxu0
    %v181 = vadd.f32 %v90, %v180
    %v182 = vpop.f32.mrf.mxu0
    %v183 = vpop.f32.mrf.mxu0
    %v184 = vadd.f32 %v90, %v183
    %v185 = vpop.f32.mrf.mxu0
    %186 = vdwg.mxu0
    %v187 = vmax.f32 %v181, 0.0
    %v188 = vmax.f32 %v184, 0.0
    %v189 = vpack.c.bf16 %v188, %v187
    %v190 = vld [vmem:[#allocation7] sm:$0xf]
    %v191 = vld [vmem:[#allocation7 + $0x4] sm:$0xf]
    %v192 = vld [vmem:[#allocation7 + $0x8] sm:$0xf]
    %v193 = vld [vmem:[#allocation7 + $0xc] sm:$0xf]
    %v194 = vld [vmem:[#allocation7 + $0x10] sm:$0xf]
    %v195 = vld [vmem:[#allocation7 + $0x14] sm:$0xf]
    %v196 = vld [vmem:[#allocation7 + $0x18] sm:$0xf]
    %v197 = vld [vmem:[#allocation7 + $0x1c] sm:$0xf]
    %v198 = vld [vmem:[#allocation7 + $0x20] sm:$0xf]
    %v199 = vld [vmem:[#allocation7 + $0x24] sm:$0xf]
    %v200 = vld [vmem:[#allocation7 + $0x28] sm:$0xf]
    %v201 = vld [vmem:[#allocation7 + $0x2c] sm:$0xf]
    %v202 = vld [vmem:[#allocation7 + $0x30] sm:$0xf]
    %v203 = vld [vmem:[#allocation7 + $0x34] sm:$0xf]
    %v204 = vld [vmem:[#allocation7 + $0x38] sm:$0xf]
    %v205 = vld [vmem:[#allocation7 + $0x3c] sm:$0xf]
    %v206 = vld [vmem:[%s4] sm:$0x1]
    %v208 = vlaneseq
    %v209 = vshrl.u32 %v208, 7
    %v210 = vsub.s32 0, %v209
    %v211 = vrot.slane %v206, %v210
    %v229 = vunpack.c.l.b16 %v190
    %v230 = vunpack.c.l.b16 %v191
    %v231 = vunpack.c.l.b16 %v192
    %v232 = vunpack.c.l.b16 %v193
    %v233 = vunpack.c.l.b16 %v194
    %v234 = vunpack.c.l.b16 %v195
    %v235 = vunpack.c.l.b16 %v196
    %v236 = vunpack.c.l.b16 %v197
    %v237 = vunpack.c.l.b16 %v198
    %v238 = vunpack.c.l.b16 %v199
    %v239 = vunpack.c.l.b16 %v200
    %v240 = vunpack.c.l.b16 %v201
    %v241 = vunpack.c.l.b16 %v202
    %v242 = vunpack.c.l.b16 %v203
    %v243 = vunpack.c.l.b16 %v204
    %v244 = vunpack.c.l.b16 %v205
    %v245 = vpack.c.b16 %v230, %v229
    %v246 = vpack.c.b16 %v232, %v231
    %v247 = vpack.c.b16 %v234, %v233
    %v248 = vpack.c.b16 %v236, %v235
    %v249 = vpack.c.b16 %v238, %v237
    %v250 = vpack.c.b16 %v240, %v239
    %v251 = vpack.c.b16 %v242, %v241
    %v252 = vpack.c.b16 %v244, %v243
    %261 = vmatprep.subr.bf16.mxu0 0
    %262 = vmatpush1.bf16.msra.mxu0 %v252
    %263 = vmatprep.subr.bf16.mxu0 0
    %264 = vmatpush1.bf16.msra.mxu0 %v251
    %265 = vmatprep.subr.bf16.mxu0 0
    %266 = vmatpush1.bf16.msra.mxu0 %v250
    %267 = vmatprep.subr.bf16.mxu0 0
    %268 = vmatpush1.bf16.msra.mxu0 %v249
    %269 = vmatprep.subr.bf16.mxu0 0
    %270 = vmatpush1.bf16.msra.mxu0 %v248
    %271 = vmatprep.subr.bf16.mxu0 0
    %272 = vmatpush1.bf16.msra.mxu0 %v247
    %273 = vmatprep.subr.bf16.mxu0 0
    %274 = vmatpush1.bf16.msra.mxu0 %v246
    %275 = vmatprep.subr.bf16.mxu0 0
    %276 = vmatpush1.bf16.msra.mxu0 %v245
    %277 = vmatprep.subr.bf16.mxu0 0
    %278 = vmatpush2.bf16.msra.mxu0 0
    %279 = vmatprep.subr.bf16.mxu0 0
    %280 = vmatpush2.bf16.msra.mxu0 0
    %281 = vmatprep.subr.bf16.mxu0 0
    %282 = vmatpush2.bf16.msra.mxu0 0
    %283 = vmatprep.subr.bf16.mxu0 0
    %284 = vmatpush2.bf16.msra.mxu0 0
    %285 = vmatprep.subr.bf16.mxu0 0
    %286 = vmatpush2.bf16.msra.mxu0 0
    %287 = vmatprep.subr.bf16.mxu0 0
    %288 = vmatpush2.bf16.msra.mxu0 0
    %289 = vmatprep.subr.bf16.mxu0 0
    %290 = vmatpush2.bf16.msra.mxu0 0
    %291 = vmatprep.subr.bf16.mxu0 0
    %292 = vmatpush2.bf16.msra.mxu0 0
    %293 = vmatprep.mubr.bf16.mxu0 0
    %294 = vmatmul.mubr.bf16.gmra.mxu0 %v189
    %v295 = vpop.f32.mrf.mxu0
    %v296 = vadd.f32 %v211, %v295
    %v297 = vpop.f32.mrf.mxu0
    %v298 = vpop.f32.mrf.mxu0
    %v299 = vadd.f32 %v211, %v298
    %v300 = vpop.f32.mrf.mxu0
    %301 = vdwg.mxu0
    %v302 = vpack.c.bf16 %v299, %v296
    %v304 = vunpack.c.l.b16 %v302
    %v305 = vunpack.c.h.b16 %v302
    %v306 = vpack.c.b16 %v304, %v304
    %v307 = vpack.c.b16 %v305, %v305
    %310 = vst [vmem:[#allocation8] sm:$0xf] %v306
    %311 = vst [vmem:[#allocation8 + $0x4] sm:$0xf] %v307
    %v312 = vunpack.c.l.bf16 %v67
    %v313 = vunpack.c.l.bf16 %v68
    %p314 = scmp.ne.s32.totalorder 0, 0
    // Predicated region
    $region34: #{tpu_custom_call.1} parent=1 // pred_check
      %p315 = pneg %p314
    $region35: #{tpu_custom_call.1} parent=1 // pred_check_branch
      %317 = sbr.rel (%p315) target = $region37
    $region36: #{tpu_custom_call.1} parent=1 // pred_region
      %v318 = vsub.f32 %v296, %v312
      %v319 = vsub.f32 %v299, %v313
      %v320 = vmul.f32 %v318, %v318
      %v321 = vmul.f32 %v319, %v319
      %v322 = vadd.f32 %v320, %v321
      %323 = vadd.xlane.f32.xlu0 %v322
      %v324 = vpop.xlane.xlu0 %323
      %v325 = vrot.slane %v324, 4
      %v326 = vadd.f32 %v324, %v325
      %v327 = vrot.slane %v326, 2
      %v328 = vadd.f32 %v326, %v327
      %v329 = vrot.slane %v328, 1
      %v330 = vadd.f32 %v328, %v329
      %s331 = vtos %v330
      %v332 = vadd.f32 %v187, %v188
      %333 = vadd.xlane.f32.xlu0 %v332
      %v334 = vpop.xlane.xlu0 %333
      %v335 = vrot.slane %v334, 4
      %v336 = vadd.f32 %v334, %v335
      %v337 = vrot.slane %v336, 2
      %v338 = vadd.f32 %v336, %v337
      %v339 = vrot.slane %v338, 1
      %v340 = vadd.f32 %v338, %v339
      %s341 = vtos %v340
      %v342 = vstv %s331
      %343 = vst [vmem:[#allocation9] sm:$0x1] %v342
      %v344 = vstv %s341
      %345 = vst [vmem:[#allocation11] sm:$0x1] %v344
    $region37: #{tpu_custom_call.1} parent=1 // pred_fallthru
      _
    %p346 = scmp.eq.s32.totalorder 0, 0
    // Predicated region
    $region38: #{tpu_custom_call.1} parent=1 // pred_check
      %p347 = pneg %p346
    $region39: #{tpu_custom_call.1} parent=1 // pred_check_branch
      %349 = sbr.rel (%p347) target = $region41
    $region40: #{tpu_custom_call.1} parent=1 // pred_region
      %v350 = vlaneseq
      %v351 = vshrl.u32 %v350, 7
      %v352 = vadd.s32 %v351, 8
      %s353 = smul.u32 0, 16
      %v354 = vstv %s353
      %v355 = vadd.s32 %v354, %v351
      %v356 = vadd.s32 %v354, %v352
      %vm357 = vcmp.lt.s32.totalorder %v355, 8
      %vm358 = vcmp.lt.s32.totalorder %v356, 8
      %v359 = vsel %vm357, 1, 0
      %v360 = vsel %vm358, 1, 0
      %v361 = vcvt.s32.f32 %v359
      %v362 = vcvt.s32.f32 %v360
      %v363 = vsub.f32 %v296, %v312
      %v364 = vsub.f32 %v299, %v313
      %v365 = vmul.f32 %v363, %v361
      %v366 = vmul.f32 %v364, %v362
      %v367 = vmul.f32 %v187, %v361
      %v368 = vmul.f32 %v188, %v362
      %v369 = vmul.f32 %v365, %v365
      %v370 = vmul.f32 %v366, %v366
      %v371 = vadd.f32 %v369, %v370
      %372 = vadd.xlane.f32.xlu0 %v371
      %v373 = vpop.xlane.xlu0 %372
      %v374 = vrot.slane %v373, 4
      %v375 = vadd.f32 %v373, %v374
      %v376 = vrot.slane %v375, 2
      %v377 = vadd.f32 %v375, %v376
      %v378 = vrot.slane %v377, 1
      %v379 = vadd.f32 %v377, %v378
      %s380 = vtos %v379
      %v381 = vadd.f32 %v367, %v368
      %382 = vadd.xlane.f32.xlu0 %v381
      %v383 = vpop.xlane.xlu0 %382
      %v384 = vrot.slane %v383, 4
      %v385 = vadd.f32 %v383, %v384
      %v386 = vrot.slane %v385, 2
      %v387 = vadd.f32 %v385, %v386
      %v388 = vrot.slane %v387, 1
      %v389 = vadd.f32 %v387, %v388
      %s390 = vtos %v389
      %v391 = vstv %s380
      %392 = vst [vmem:[#allocation9] sm:$0x1] %v391
      %v393 = vstv %s390
      %394 = vst [vmem:[#allocation11] sm:$0x1] %v393
    $region41: #{tpu_custom_call.1} parent=1 // pred_fallthru
      _
    // Predicated region
    $region42: #{tpu_custom_call.1} parent=1 // pred_check
      _
    $region43: #{tpu_custom_call.1} parent=1 // pred_check_branch
      %396 = sbr.rel (0) target = $region45
    $region44: #{tpu_custom_call.1} parent=1 // pred_region
      %s398 = ssub.s32 128, 128
      %399 = vsyncadd [#allocation4], %s398
      %s400 = sshll.u32 [#allocation8], 4
      %s401 = int_to_ptr.vmem [resolvable:$true] %s400
      %406 = dma.vmem_to_hbm [thread:$0]  %s401, 128, %s5, [#allocation4], 64, 64, 4
    $region45: #{tpu_custom_call.1} parent=1 // pred_fallthru
      _
    // Predicated region
    $region46: #{tpu_custom_call.1} parent=1 // pred_check
      _
    $region47: #{tpu_custom_call.1} parent=1 // pred_check_branch
      %408 = sbr.rel (0) target = $region49
    $region48: #{tpu_custom_call.1} parent=1 // pred_region
      %s410 = ssub.s32 16, 16
      %411 = vsyncadd [#allocation10], %s410
      %s413 = sshll.u32 [#allocation9], 4
      %s414 = int_to_ptr.vmem [resolvable:$true] %s413
      %416 = dma.vmem_to_hbm [thread:$0]  %s414, 16, %s6, [#allocation10]
    $region49: #{tpu_custom_call.1} parent=1 // pred_fallthru
      _
    // Predicated region
    $region50: #{tpu_custom_call.1} parent=1 // pred_check
      _
    $region51: #{tpu_custom_call.1} parent=1 // pred_check_branch
      %418 = sbr.rel (0) target = $region53
    $region52: #{tpu_custom_call.1} parent=1 // pred_region
      %s420 = ssub.s32 16, 16
      %421 = vsyncadd [#allocation10], %s420
      %s423 = sshll.u32 [#allocation11], 4
      %s424 = int_to_ptr.vmem [resolvable:$true] %s423
      %426 = dma.vmem_to_hbm [thread:$0]  %s424, 16, %s7, [#allocation10]
    $region53: #{tpu_custom_call.1} parent=1 // pred_fallthru
      _
    // Predicated region
    $region54: #{tpu_custom_call.1} parent=1 // pred_check
      _
    $region55: #{tpu_custom_call.1} parent=1 // pred_check_branch
      %428 = sbr.rel (0) target = $region57
    $region56: #{tpu_custom_call.1} parent=1 // pred_region
      %429 = dma.done [#allocation4], 128
    $region57: #{tpu_custom_call.1} parent=1 // pred_fallthru
      _
    // Predicated region
    $region58: #{tpu_custom_call.1} parent=1 // pred_check
      _
    $region59: #{tpu_custom_call.1} parent=1 // pred_check_branch
      %431 = sbr.rel (0) target = $region61
    $region60: #{tpu_custom_call.1} parent=1 // pred_region
      %432 = dma.done [#allocation10], 16
    $region61: #{tpu_custom_call.1} parent=1 // pred_fallthru
      _
    // Predicated region
    $region62: #{tpu_custom_call.1} parent=1 // pred_check
      _
    $region63: #{tpu_custom_call.1} parent=1 // pred_check_branch
      %434 = sbr.rel (0) target = $region65
    $region64: #{tpu_custom_call.1} parent=1 // pred_region
      %435 = dma.done [#allocation10], 16
    $region65: #{tpu_custom_call.1} parent=1 // pred_fallthru
      _
    %436 = vsyncpa [#allocation3], 1
    %437 = vsyncpa [#allocation6], 1
    %438 = vsyncpa [#allocation4], 1
    %439 = vsyncpa [#allocation10], 1

</llo_original>
